<compile_context>
chip_gen: v6e
topology: v6e:2x2x1
jax: 0.10.0
libtpu: 0.0.40
codegen_flags: <defaults>
</compile_context>

<pallas_src>
import functools

import jax
import jax.numpy as jnp
import numpy as np
from jax.experimental import pallas as pl
from jax.experimental.pallas import tpu as pltpu  # noqa: F401  (TPU backend module)

GUMBEL_EPS = 1e-20      # GumbelSoftmax(eps=1e-20)
TEMP = 0.01             # GumbelSoftmax(t=0.01)
INV_TEMP = 1.0 / TEMP
F32 = jnp.float32
BF16 = jnp.bfloat16


def _feed_embed_kernel(u_ref, u01_ref, e_ref, out_ref):
    """Fused Gumbel-softmax + embedding matmul on one (M, V) block."""
    # gumbel_sample: -log(-log(U + eps) + eps)   (all f32 — v5e EUP/VPU have no bf16)
    g = -jnp.log(-jnp.log(u01_ref[...] + GUMBEL_EPS) + GUMBEL_EPS)

    # gumbel_softmax_sample: softmax((logits + g) / t) along the vocab axis.
    y = (u_ref[...] + g) * INV_TEMP
    y = y - jnp.max(y, axis=-1, keepdims=True)
    p = jnp.exp(y)                                           # un-normalized weights
    inv_s = 1.0 / jnp.sum(p, axis=-1, keepdims=True)         # one divide per row

    # O_hat @ E.weight on the MXU: bf16 operands, f32 accumulation; the softmax
    # normalization (1/s per row) is folded into a post-matmul scale.
    acc = jnp.dot(p.astype(BF16), e_ref[...],
                  preferred_element_type=jnp.float32)
    out_ref[...] = acc * inv_s


@jax.jit
def feed_embed_forward(u, e_weight_bf16, uniform01):
    """out[..., :] = softmax((u + Gumbel)/t, -1) @ E.weight, fused in one kernel.

    u            : (..., V) logits, any float dtype
    e_weight_bf16: (V, D) embedding table, bf16 (persistent bf16 copy of E.weight)
    uniform01    : (..., V) U[0,1) draws (same leading shape as u)
    """
    *lead, V = u.shape
    Vw, D = e_weight_bf16.shape
    assert V == Vw, "logit width must match the embedding vocabulary size"

    u2d = u.reshape(-1, V).astype(F32)
    n2d = uniform01.reshape(-1, V).astype(F32)
    M = u2d.shape[0]

    # Whole problem (~tens of KB) in a single grid step / single block per operand:
    # at this size the kernel is fixed-overhead bound, so one step + one DMA per
    # operand is the fastest schedule on v5e/v6e/v7x alike.
    # TODO(synk): for large M, split the row axis into an even number of blocks with
    # dimension_semantics=("parallel",) so v7x's two TensorCores both get work.
    out2d = pl.pallas_call(
        _feed_embed_kernel,
        out_shape=jax.ShapeDtypeStruct((M, D), F32),
        grid=(1,),
        in_specs=[
            pl.BlockSpec((M, V), lambda i: (0, 0)),   # logits
            pl.BlockSpec((M, V), lambda i: (0, 0)),   # uniform noise
            pl.BlockSpec((V, D), lambda i: (0, 0)),   # embedding table (bf16)
        ],
        out_specs=pl.BlockSpec((M, D), lambda i: (0, 0)),
    )(u2d, n2d, e_weight_bf16)
    return out2d.reshape(*lead, D)


if __name__ == "__main__":
    root = jax.random.PRNGKey(0)
    k_u, k_e, k_n = jax.random.split(root, 3)

    # Small shapes consistent with the VAE notebook: vocab=32, emb_dim=32, seq=8, batch=8.
    S, B, V, D = 8, 8, 32, 32
    u = jax.random.normal(k_u, (S, B, V), dtype=jnp.float32)
    e_weight = (0.1 * jax.random.normal(k_e, (V, D))).astype(jnp.float32)   # E.weight
    uniform01 = jax.random.uniform(k_n, (S, B, V), dtype=jnp.float32)       # torch.rand

    e_weight_bf16 = e_weight.astype(BF16)   # persistent bf16 copy (halves its DMA)

    out = feed_embed_forward(u, e_weight_bf16, uniform01)
    jax.block_until_ready(out)

    # Pure-JAX reference with the SAME uniform draws -> exact functional check
    # (tolerances cover the bf16 MXU operands, f32 accumulation).
    g = -jnp.log(-jnp.log(uniform01 + GUMBEL_EPS) + GUMBEL_EPS)
    o_hat = jax.nn.softmax((u + g) * INV_TEMP, axis=-1)
    ref = o_hat @ e_weight

    assert out.shape == (S, B, D) and out.dtype == jnp.float32
    assert bool(jnp.all(jnp.isfinite(out)))
    np.testing.assert_allclose(np.asarray(out), np.asarray(ref), atol=5e-3, rtol=5e-2)

    # Convex-combination invariant: every output row is a simplex-weighted mix of
    # embedding rows, so each column lies within that column's [min, max] (+ bf16 slack).
    out2d = np.asarray(out).reshape(-1, D)
    col_min = np.min(e_weight, axis=0) - 5e-3
    col_max = np.max(e_weight, axis=0) + 5e-3
    assert np.all(out2d >= col_min) and np.all(out2d <= col_max)

    print("KERNEL_OK")
</pallas_src>

<mosaic_0001>
module attributes {stable_mosaic.version = 11 : i64} {
  func.func @_feed_embed_kernel(%arg0: i32, %arg1: memref<64x32xf32, #tpu.memory_space<vmem>>, %arg2: memref<64x32xf32, #tpu.memory_space<vmem>>, %arg3: memref<32x32xbf16, #tpu.memory_space<vmem>>, %arg4: memref<64x32xf32, #tpu.memory_space<vmem>>) attributes {dimension_semantics = [#tpu.dimension_semantics<arbitrary>], iteration_bounds = array<i64: 1>, scalar_prefetch = 0 : i64, scratch_operands = 0 : i64, tpu.core_type = #tpu.core_type<tc>, window_params = [{pipeline_mode = #tpu.pipeline_mode<synchronous>, transform_indices = @transform_0, window_bounds = array<i64: 64, 32>}, {pipeline_mode = #tpu.pipeline_mode<synchronous>, transform_indices = @transform_1, window_bounds = array<i64: 64, 32>}, {pipeline_mode = #tpu.pipeline_mode<synchronous>, transform_indices = @transform_2, window_bounds = array<i64: 32, 32>}, {pipeline_mode = #tpu.pipeline_mode<synchronous>, transform_indices = @transform_3, window_bounds = array<i64: 64, 32>}]} {
    %c0 = arith.constant 0 : index
    %c0_0 = arith.constant 0 : index
    %0 = vector.load %arg2[%c0, %c0_0] : memref<64x32xf32, #tpu.memory_space<vmem>>, vector<64x32xf32>
    %cst = arith.constant 9.99999968E-21 : f32
    %1 = vector.broadcast %cst : f32 to vector<64x32xf32>
    %2 = arith.addf %0, %1 : vector<64x32xf32>
    %3 = math.log %2 : vector<64x32xf32>
    %cst_1 = arith.constant 0.000000e+00 : f32
    %4 = vector.broadcast %cst_1 : f32 to vector<64x32xf32>
    %5 = arith.subf %4, %3 : vector<64x32xf32>
    %cst_2 = arith.constant 9.99999968E-21 : f32
    %6 = vector.broadcast %cst_2 : f32 to vector<64x32xf32>
    %7 = arith.addf %5, %6 : vector<64x32xf32>
    %8 = math.log %7 : vector<64x32xf32>
    %cst_3 = arith.constant 0.000000e+00 : f32
    %9 = vector.broadcast %cst_3 : f32 to vector<64x32xf32>
    %10 = arith.subf %9, %8 : vector<64x32xf32>
    %c0_4 = arith.constant 0 : index
    %c0_5 = arith.constant 0 : index
    %11 = vector.load %arg1[%c0_4, %c0_5] : memref<64x32xf32, #tpu.memory_space<vmem>>, vector<64x32xf32>
    %12 = arith.addf %11, %10 : vector<64x32xf32>
    %cst_6 = arith.constant 1.000000e+02 : f32
    %13 = vector.broadcast %cst_6 : f32 to vector<64x32xf32>
    %14 = arith.mulf %12, %13 : vector<64x32xf32>
    %cst_7 = arith.constant dense<0xFF800000> : vector<64xf32>
    %15 = vector.multi_reduction <maximumf>, %14, %cst_7 [1] : vector<64x32xf32> to vector<64xf32>
    %16 = vector.shape_cast %15 : vector<64xf32> to vector<64x1xf32>
    %17 = vector.broadcast %16 : vector<64x1xf32> to vector<64x32xf32>
    %18 = arith.subf %14, %17 : vector<64x32xf32>
    %19 = math.exp %18 : vector<64x32xf32>
    %cst_8 = arith.constant dense<0.000000e+00> : vector<64xf32>
    %20 = vector.multi_reduction <add>, %19, %cst_8 [1] : vector<64x32xf32> to vector<64xf32>
    %21 = vector.shape_cast %20 : vector<64xf32> to vector<64x1xf32>
    %cst_9 = arith.constant 1.000000e+00 : f32
    %22 = vector.broadcast %cst_9 : f32 to vector<64x1xf32>
    %23 = arith.divf %22, %21 : vector<64x1xf32>
    %24 = arith.truncf %19 : vector<64x32xf32> to vector<64x32xbf16>
    %c0_10 = arith.constant 0 : index
    %c0_11 = arith.constant 0 : index
    %25 = vector.load %arg3[%c0_10, %c0_11] : memref<32x32xbf16, #tpu.memory_space<vmem>>, vector<32x32xbf16>
    %cst_12 = arith.constant dense<0.000000e+00> : vector<64x32xf32>
    %26 = tpu.matmul %24, %25, %cst_12 {dimension_numbers = #tpu.dot_dimension_numbers<[1], [0], [0], [1], [0, 0, 1, 1], [], []>} : vector<64x32xbf16>, vector<32x32xbf16>, vector<64x32xf32> -> vector<64x32xf32>
    %27 = vector.broadcast %23 : vector<64x1xf32> to vector<64x32xf32>
    %28 = arith.mulf %26, %27 : vector<64x32xf32>
    %c0_13 = arith.constant 0 : index
    %c0_14 = arith.constant 0 : index
    %29 = vector.load %arg4[%c0_13, %c0_14] : memref<64x32xf32, #tpu.memory_space<vmem>>, vector<64x32xf32>
    tpu.vector_store %arg4[%c0_13, %c0_14], %28 {strides = array<i32>} : memref<64x32xf32, #tpu.memory_space<vmem>>, vector<64x32xf32>,
    return
  }
  func.func @transform_0(%arg0: i32) -> (i32, i32) {
    %c0_i32 = arith.constant 0 : i32
    %c0_i32_0 = arith.constant 0 : i32
    %c0_i32_1 = arith.constant 0 : i32
    return %c0_i32, %c0_i32_0 : i32, i32
  }
  func.func @transform_1(%arg0: i32) -> (i32, i32) {
    %c0_i32 = arith.constant 0 : i32
    %c0_i32_0 = arith.constant 0 : i32
    %c0_i32_1 = arith.constant 0 : i32
    return %c0_i32, %c0_i32_0 : i32, i32
  }
  func.func @transform_2(%arg0: i32) -> (i32, i32) {
    %c0_i32 = arith.constant 0 : i32
    %c0_i32_0 = arith.constant 0 : i32
    %c0_i32_1 = arith.constant 0 : i32
    return %c0_i32, %c0_i32_0 : i32, i32
  }
  func.func @transform_3(%arg0: i32) -> (i32, i32) {
    %c0_i32 = arith.constant 0 : i32
    %c0_i32_0 = arith.constant 0 : i32
    %c0_i32_1 = arith.constant 0 : i32
    return %c0_i32, %c0_i32_0 : i32, i32
  }
}

</mosaic_0001>

<llo_original>
// kernel: feed_embed_forward.1
$region0: #{feed_embed_forward.1}
  #allocation0 [shape = 'u32[]', space=smem, size = 0x4, offset = 0x4, fixed_abs, tag = 'smem constant byte address 0x4 - core index']
  #allocation1 [shape = 'u32[144,128]{1,0:T(1,128)}', space=vmem, size = 0x12000, scoped, tag = 'internal scratch']
  %s0 = inlined_call_operand.hbm [shape: f32[64,32], index: 0, kind: input, shape index: {}]
  %s1 = inlined_call_operand.hbm [shape: f32[64,32], index: 1, kind: input, shape index: {}]
  %s2 = inlined_call_operand.hbm [shape: bf16[32,32], index: 2, kind: input, shape index: {}]
  %s3 = inlined_call_operand.hbm [shape: f32[64,32], index: 3, kind: output, shape index: {}]
  %s4 = sld [smem:[#allocation0]]
  $region34: #{feed_embed_forward.1} parent=0
    _
  %s6 = ssub.s32 1, %s4
  %s7 = scalar_select 0, %s6, %s4
  $region1: #{feed_embed_forward.1} parent=0
    #allocation2 [shape = 'u8[32768]{0}', space=vmem, size = 0x8000, scoped, tag = 'input window, operand 0, single buffered']
    #allocation3 [shape = 's32[1]{0}', space=sflag, size = 0x4, scoped, tag = 'scoped memory for feed_embed_forward.1']
    #allocation4 [shape = 's32[1]{0}', space=sflag, size = 0x4, scoped, tag = 'scoped memory for feed_embed_forward.1']
    #allocation5 [shape = 'u8[32768]{0}', space=vmem, size = 0x8000, scoped, tag = 'input window, operand 1, single buffered']
    #allocation6 [shape = 's32[1]{0}', space=sflag, size = 0x4, scoped, tag = 'scoped memory for feed_embed_forward.1']
    #allocation7 [shape = 'u8[8192]{0}', space=vmem, size = 0x2000, scoped, tag = 'input window, operand 2, single buffered']
    #allocation8 [shape = 'u8[32768]{0}', space=vmem, size = 0x8000, scoped, tag = 'output window, operand 0, single buffered']
    %8 = vsyncpa [#allocation3], 0
    %9 = vsyncpa [#allocation6], 0
    %10 = vsyncpa [#allocation4], 0
    // Predicated region
    $region2: #{feed_embed_forward.1} parent=1 // pred_check
      _
    $region3: #{feed_embed_forward.1} parent=1 // pred_check_branch
      %12 = sbr.rel (0) target = $region5
    $region4: #{feed_embed_forward.1} parent=1 // pred_region
      %s14 = ssub.s32 1024, 1024
      %15 = vsyncadd [#allocation3], %s14
      %s16 = sshll.u32 [#allocation2], 4
      %s17 = int_to_ptr.vmem [resolvable:$true] %s16
      %22 = dma.hbm_to_vmem [thread:$0]  %s0, 1024, %s17, [#allocation3], 128, 128, 8
    $region5: #{feed_embed_forward.1} parent=1 // pred_fallthru
      _
    // Predicated region
    $region6: #{feed_embed_forward.1} parent=1 // pred_check
      _
    $region7: #{feed_embed_forward.1} parent=1 // pred_check_branch
      %24 = sbr.rel (0) target = $region9
    $region8: #{feed_embed_forward.1} parent=1 // pred_region
      %s26 = ssub.s32 1024, 1024
      %27 = vsyncadd [#allocation6], %s26
      %s28 = sshll.u32 [#allocation5], 4
      %s29 = int_to_ptr.vmem [resolvable:$true] %s28
      %34 = dma.hbm_to_vmem [thread:$0]  %s1, 1024, %s29, [#allocation6], 128, 128, 8
    $region9: #{feed_embed_forward.1} parent=1 // pred_fallthru
      _
    // Predicated region
    $region10: #{feed_embed_forward.1} parent=1 // pred_check
      _
    $region11: #{feed_embed_forward.1} parent=1 // pred_check_branch
      %36 = sbr.rel (0) target = $region13
    $region12: #{feed_embed_forward.1} parent=1 // pred_region
      %s38 = ssub.s32 256, 256
      %39 = vsyncadd [#allocation6], %s38
      %s40 = sshll.u32 [#allocation7], 4
      %s41 = int_to_ptr.vmem [resolvable:$true] %s40
      %46 = dma.hbm_to_vmem [thread:$0]  %s2, 256, %s41, [#allocation6], 64, 64, 4
    $region13: #{feed_embed_forward.1} parent=1 // pred_fallthru
      _
    // Predicated region
    $region14: #{feed_embed_forward.1} parent=1 // pred_check
      _
    $region15: #{feed_embed_forward.1} parent=1 // pred_check_branch
      %48 = sbr.rel (0) target = $region17
    $region16: #{feed_embed_forward.1} parent=1 // pred_region
      %49 = dma.done [#allocation3], 1024
    $region17: #{feed_embed_forward.1} parent=1 // pred_fallthru
      _
    // Predicated region
    $region18: #{feed_embed_forward.1} parent=1 // pred_check
      _
    $region19: #{feed_embed_forward.1} parent=1 // pred_check_branch
      %51 = sbr.rel (0) target = $region21
    $region20: #{feed_embed_forward.1} parent=1 // pred_region
      %52 = dma.done [#allocation6], 1024
    $region21: #{feed_embed_forward.1} parent=1 // pred_fallthru
      _
    // Predicated region
    $region22: #{feed_embed_forward.1} parent=1 // pred_check
      _
    $region23: #{feed_embed_forward.1} parent=1 // pred_check_branch
      %54 = sbr.rel (0) target = $region25
    $region24: #{feed_embed_forward.1} parent=1 // pred_region
      %55 = dma.done [#allocation6], 256
    $region25: #{feed_embed_forward.1} parent=1 // pred_fallthru
      _
    %v57 = vld [vmem:[#allocation5] sm:$0xff]
    %v58 = vld [vmem:[#allocation5 + $0x8] sm:$0xff]
    %v59 = vld [vmem:[#allocation5 + $0x10] sm:$0xff]
    %v60 = vld [vmem:[#allocation5 + $0x18] sm:$0xff]
    %v61 = vld [vmem:[#allocation5 + $0x20] sm:$0xff]
    %v62 = vld [vmem:[#allocation5 + $0x28] sm:$0xff]
    %v63 = vld [vmem:[#allocation5 + $0x30] sm:$0xff]
    %v64 = vld [vmem:[#allocation5 + $0x38] sm:$0xff]
    %v65 = vadd.f32 %v57, 1e-20
    %v66 = vadd.f32 %v58, 1e-20
    %v67 = vadd.f32 %v59, 1e-20
    %v68 = vadd.f32 %v60, 1e-20
    %v69 = vadd.f32 %v61, 1e-20
    %v70 = vadd.f32 %v62, 1e-20
    %v71 = vadd.f32 %v63, 1e-20
    %v72 = vadd.f32 %v64, 1e-20
    %v73 = vlog2.pop %v65
    %v74 = vmul.f32 %v73, 0.6931472
    %v75 = vlog2.pop %v66
    %v76 = vmul.f32 %v75, 0.6931472
    %v77 = vlog2.pop %v67
    %v78 = vmul.f32 %v77, 0.6931472
    %v79 = vlog2.pop %v68
    %v80 = vmul.f32 %v79, 0.6931472
    %v81 = vlog2.pop %v69
    %v82 = vmul.f32 %v81, 0.6931472
    %v83 = vlog2.pop %v70
    %v84 = vmul.f32 %v83, 0.6931472
    %v85 = vlog2.pop %v71
    %v86 = vmul.f32 %v85, 0.6931472
    %v87 = vlog2.pop %v72
    %v88 = vmul.f32 %v87, 0.6931472
    %v89 = vsub.f32 0.0, %v74
    %v90 = vsub.f32 0.0, %v76
    %v91 = vsub.f32 0.0, %v78
    %v92 = vsub.f32 0.0, %v80
    %v93 = vsub.f32 0.0, %v82
    %v94 = vsub.f32 0.0, %v84
    %v95 = vsub.f32 0.0, %v86
    %v96 = vsub.f32 0.0, %v88
    %v97 = vadd.f32 %v89, 1e-20
    %v98 = vadd.f32 %v90, 1e-20
    %v99 = vadd.f32 %v91, 1e-20
    %v100 = vadd.f32 %v92, 1e-20
    %v101 = vadd.f32 %v93, 1e-20
    %v102 = vadd.f32 %v94, 1e-20
    %v103 = vadd.f32 %v95, 1e-20
    %v104 = vadd.f32 %v96, 1e-20
    %v105 = vlog2.pop %v97
    %v106 = vmul.f32 %v105, 0.6931472
    %v107 = vlog2.pop %v98
    %v108 = vmul.f32 %v107, 0.6931472
    %v109 = vlog2.pop %v99
    %v110 = vmul.f32 %v109, 0.6931472
    %v111 = vlog2.pop %v100
    %v112 = vmul.f32 %v111, 0.6931472
    %v113 = vlog2.pop %v101
    %v114 = vmul.f32 %v113, 0.6931472
    %v115 = vlog2.pop %v102
    %v116 = vmul.f32 %v115, 0.6931472
    %v117 = vlog2.pop %v103
    %v118 = vmul.f32 %v117, 0.6931472
    %v119 = vlog2.pop %v104
    %v120 = vmul.f32 %v119, 0.6931472
    %v121 = vsub.f32 0.0, %v106
    %v122 = vsub.f32 0.0, %v108
    %v123 = vsub.f32 0.0, %v110
    %v124 = vsub.f32 0.0, %v112
    %v125 = vsub.f32 0.0, %v114
    %v126 = vsub.f32 0.0, %v116
    %v127 = vsub.f32 0.0, %v118
    %v128 = vsub.f32 0.0, %v120
    %v129 = vld [vmem:[#allocation2] sm:$0xff]
    %v130 = vld [vmem:[#allocation2 + $0x8] sm:$0xff]
    %v131 = vld [vmem:[#allocation2 + $0x10] sm:$0xff]
    %v132 = vld [vmem:[#allocation2 + $0x18] sm:$0xff]
    %v133 = vld [vmem:[#allocation2 + $0x20] sm:$0xff]
    %v134 = vld [vmem:[#allocation2 + $0x28] sm:$0xff]
    %v135 = vld [vmem:[#allocation2 + $0x30] sm:$0xff]
    %v136 = vld [vmem:[#allocation2 + $0x38] sm:$0xff]
    %v137 = vadd.f32 %v129, %v121
    %v138 = vadd.f32 %v130, %v122
    %v139 = vadd.f32 %v131, %v123
    %v140 = vadd.f32 %v132, %v124
    %v141 = vadd.f32 %v133, %v125
    %v142 = vadd.f32 %v134, %v126
    %v143 = vadd.f32 %v135, %v127
    %v144 = vadd.f32 %v136, %v128
    %v145 = vmul.f32 %v137, 100.0
    %v146 = vmul.f32 %v138, 100.0
    %v147 = vmul.f32 %v139, 100.0
    %v148 = vmul.f32 %v140, 100.0
    %v149 = vmul.f32 %v141, 100.0
    %v150 = vmul.f32 %v142, 100.0
    %v151 = vmul.f32 %v143, 100.0
    %v152 = vmul.f32 %v144, 100.0
    %vm153 = vcmask 261120
    %v154 = vsel %vm153, %v145, -inf
    %155 = vmax.xlane.f32.xlu0 %v154
    %v156 = vpop.xlane.xlu0 %155
    %v157 = vsel %vm153, %v146, -inf
    %158 = vmax.xlane.f32.xlu0 %v157
    %v159 = vpop.xlane.xlu0 %158
    %v160 = vsel %vm153, %v147, -inf
    %161 = vmax.xlane.f32.xlu0 %v160
    %v162 = vpop.xlane.xlu0 %161
    %v163 = vsel %vm153, %v148, -inf
    %164 = vmax.xlane.f32.xlu0 %v163
    %v165 = vpop.xlane.xlu0 %164
    %v166 = vsel %vm153, %v149, -inf
    %167 = vmax.xlane.f32.xlu0 %v166
    %v168 = vpop.xlane.xlu0 %167
    %v169 = vsel %vm153, %v150, -inf
    %170 = vmax.xlane.f32.xlu0 %v169
    %v171 = vpop.xlane.xlu0 %170
    %v172 = vsel %vm153, %v151, -inf
    %173 = vmax.xlane.f32.xlu0 %v172
    %v174 = vpop.xlane.xlu0 %173
    %v175 = vsel %vm153, %v152, -inf
    %176 = vmax.xlane.f32.xlu0 %v175
    %v177 = vpop.xlane.xlu0 %176
    %v178 = vsub.f32 %v145, %v156
    %v179 = vsub.f32 %v146, %v159
    %v180 = vsub.f32 %v147, %v162
    %v181 = vsub.f32 %v148, %v165
    %v182 = vsub.f32 %v149, %v168
    %v183 = vsub.f32 %v150, %v171
    %v184 = vsub.f32 %v151, %v174
    %v185 = vsub.f32 %v152, %v177
    %v186 = vmul.f32 %v178, 1.442695
    %v187 = vpow.pop %v186
    %v188 = vmul.f32 %v179, 1.442695
    %v189 = vpow.pop %v188
    %v190 = vmul.f32 %v180, 1.442695
    %v191 = vpow.pop %v190
    %v192 = vmul.f32 %v181, 1.442695
    %v193 = vpow.pop %v192
    %v194 = vmul.f32 %v182, 1.442695
    %v195 = vpow.pop %v194
    %v196 = vmul.f32 %v183, 1.442695
    %v197 = vpow.pop %v196
    %v198 = vmul.f32 %v184, 1.442695
    %v199 = vpow.pop %v198
    %v200 = vmul.f32 %v185, 1.442695
    %v201 = vpow.pop %v200
    %v202 = vsel %vm153, %v187, 0.0
    %203 = vadd.xlane.f32.xlu0 %v202
    %v204 = vpop.xlane.xlu0 %203
    %v205 = vsel %vm153, %v189, 0.0
    %206 = vadd.xlane.f32.xlu0 %v205
    %v207 = vpop.xlane.xlu0 %206
    %v208 = vsel %vm153, %v191, 0.0
    %209 = vadd.xlane.f32.xlu0 %v208
    %v210 = vpop.xlane.xlu0 %209
    %v211 = vsel %vm153, %v193, 0.0
    %212 = vadd.xlane.f32.xlu0 %v211
    %v213 = vpop.xlane.xlu0 %212
    %v214 = vsel %vm153, %v195, 0.0
    %215 = vadd.xlane.f32.xlu0 %v214
    %v216 = vpop.xlane.xlu0 %215
    %v217 = vsel %vm153, %v197, 0.0
    %218 = vadd.xlane.f32.xlu0 %v217
    %v219 = vpop.xlane.xlu0 %218
    %v220 = vsel %vm153, %v199, 0.0
    %221 = vadd.xlane.f32.xlu0 %v220
    %v222 = vpop.xlane.xlu0 %221
    %v223 = vsel %vm153, %v201, 0.0
    %224 = vadd.xlane.f32.xlu0 %v223
    %v225 = vpop.xlane.xlu0 %224
    %v226 = vrcp.pop %v204
    %v227 = vmul.f32 1.0, %v226
    %v228 = vrcp.pop %v207
    %v229 = vmul.f32 1.0, %v228
    %v230 = vrcp.pop %v210
    %v231 = vmul.f32 1.0, %v230
    %v232 = vrcp.pop %v213
    %v233 = vmul.f32 1.0, %v232
    %v234 = vrcp.pop %v216
    %v235 = vmul.f32 1.0, %v234
    %v236 = vrcp.pop %v219
    %v237 = vmul.f32 1.0, %v236
    %v238 = vrcp.pop %v222
    %v239 = vmul.f32 1.0, %v238
    %v240 = vrcp.pop %v225
    %v241 = vmul.f32 1.0, %v240
    %v242 = vpack.c.bf16 %v189, %v187
    %v243 = vpack.c.bf16 %v193, %v191
    %v244 = vpack.c.bf16 %v197, %v195
    %v245 = vpack.c.bf16 %v201, %v199
    %v246 = vld [vmem:[#allocation7] sm:$0xf]
    %v247 = vld [vmem:[#allocation7 + $0x4] sm:$0xf]
    %v248 = vld [vmem:[#allocation7 + $0x8] sm:$0xf]
    %v249 = vld [vmem:[#allocation7 + $0xc] sm:$0xf]
    %v254 = vunpack.c.l.b16 %v246
    %v255 = vunpack.c.l.b16 %v247
    %v256 = vunpack.c.l.b16 %v248
    %v257 = vunpack.c.l.b16 %v249
    %v258 = vpack.c.b16 %v255, %v254
    %v259 = vpack.c.b16 %v257, %v256
    %v263 = vsel %vm153, %v242, 0
    %v266 = vsel %vm153, %v243, 0
    %v269 = vsel %vm153, %v244, 0
    %v272 = vsel %vm153, %v245, 0
    %274 = vmatprep.subr.bf16.mxu0 0
    %275 = vmatpush1.bf16.msra.mxu0 0
    %276 = vmatprep.subr.bf16.mxu0 0
    %277 = vmatpush1.bf16.msra.mxu0 0
    %278 = vmatprep.subr.bf16.mxu0 0
    %279 = vmatpush1.bf16.msra.mxu0 0
    %280 = vmatprep.subr.bf16.mxu0 0
    %281 = vmatpush1.bf16.msra.mxu0 0
    %282 = vmatprep.subr.bf16.mxu0 0
    %283 = vmatpush1.bf16.msra.mxu0 0
    %284 = vmatprep.subr.bf16.mxu0 0
    %285 = vmatpush1.bf16.msra.mxu0 0
    %286 = vmatprep.subr.bf16.mxu0 0
    %287 = vmatpush1.bf16.msra.mxu0 %v259
    %288 = vmatprep.subr.bf16.mxu0 0
    %289 = vmatpush1.bf16.msra.mxu0 %v258
    %290 = vmatprep.subr.bf16.mxu0 0
    %291 = vmatpush2.bf16.msra.mxu0 0
    %292 = vmatprep.subr.bf16.mxu0 0
    %293 = vmatpush2.bf16.msra.mxu0 0
    %294 = vmatprep.subr.bf16.mxu0 0
    %295 = vmatpush2.bf16.msra.mxu0 0
    %296 = vmatprep.subr.bf16.mxu0 0
    %297 = vmatpush2.bf16.msra.mxu0 0
    %298 = vmatprep.subr.bf16.mxu0 0
    %299 = vmatpush2.bf16.msra.mxu0 0
    %300 = vmatprep.subr.bf16.mxu0 0
    %301 = vmatpush2.bf16.msra.mxu0 0
    %302 = vmatprep.subr.bf16.mxu0 0
    %303 = vmatpush2.bf16.msra.mxu0 0
    %304 = vmatprep.subr.bf16.mxu0 0
    %305 = vmatpush2.bf16.msra.mxu0 0
    %306 = vmatprep.mubr.bf16.mxu0 0
    %307 = vmatmul.mubr.bf16.gmra.mxu0 %v263
    %v308 = vpop.f32.mrf.mxu0
    %v309 = vadd.f32 0.0, %v308
    %v310 = vpop.f32.mrf.mxu0
    %v311 = vpop.f32.mrf.mxu0
    %v312 = vadd.f32 0.0, %v311
    %v313 = vpop.f32.mrf.mxu0
    %314 = vmatprep.mubr.bf16.mxu0 0
    %315 = vmatmul.mubr.bf16.gmra.mxu0 %v266
    %v316 = vpop.f32.mrf.mxu0
    %v317 = vadd.f32 0.0, %v316
    %v318 = vpop.f32.mrf.mxu0
    %v319 = vpop.f32.mrf.mxu0
    %v320 = vadd.f32 0.0, %v319
    %v321 = vpop.f32.mrf.mxu0
    %322 = vmatprep.mubr.bf16.mxu0 0
    %323 = vmatmul.mubr.bf16.gmra.mxu0 %v269
    %v324 = vpop.f32.mrf.mxu0
    %v325 = vadd.f32 0.0, %v324
    %v326 = vpop.f32.mrf.mxu0
    %v327 = vpop.f32.mrf.mxu0
    %v328 = vadd.f32 0.0, %v327
    %v329 = vpop.f32.mrf.mxu0
    %330 = vmatprep.mubr.bf16.mxu0 0
    %331 = vmatmul.mubr.bf16.gmra.mxu0 %v272
    %v332 = vpop.f32.mrf.mxu0
    %v333 = vadd.f32 0.0, %v332
    %v334 = vpop.f32.mrf.mxu0
    %v335 = vpop.f32.mrf.mxu0
    %v336 = vadd.f32 0.0, %v335
    %v337 = vpop.f32.mrf.mxu0
    %338 = vdwg.mxu0
    %v339 = vmul.f32 %v309, %v227
    %v340 = vmul.f32 %v312, %v229
    %v341 = vmul.f32 %v317, %v231
    %v342 = vmul.f32 %v320, %v233
    %v343 = vmul.f32 %v325, %v235
    %v344 = vmul.f32 %v328, %v237
    %v345 = vmul.f32 %v333, %v239
    %v346 = vmul.f32 %v336, %v241
    %347 = vst.msk [vmem:[#allocation8] sm:$0xff] %vm153, %v339
    %348 = vst.msk [vmem:[#allocation8 + $0x8] sm:$0xff] %vm153, %v340
    %349 = vst.msk [vmem:[#allocation8 + $0x10] sm:$0xff] %vm153, %v341
    %350 = vst.msk [vmem:[#allocation8 + $0x18] sm:$0xff] %vm153, %v342
    %351 = vst.msk [vmem:[#allocation8 + $0x20] sm:$0xff] %vm153, %v343
    %352 = vst.msk [vmem:[#allocation8 + $0x28] sm:$0xff] %vm153, %v344
    %353 = vst.msk [vmem:[#allocation8 + $0x30] sm:$0xff] %vm153, %v345
    %354 = vst.msk [vmem:[#allocation8 + $0x38] sm:$0xff] %vm153, %v346
    // Predicated region
    $region26: #{feed_embed_forward.1} parent=1 // pred_check
      _
    $region27: #{feed_embed_forward.1} parent=1 // pred_check_branch
      %356 = sbr.rel (0) target = $region29
    $region28: #{feed_embed_forward.1} parent=1 // pred_region
      %s358 = ssub.s32 1024, 1024
      %359 = vsyncadd [#allocation4], %s358
      %s360 = sshll.u32 [#allocation8], 4
      %s361 = int_to_ptr.vmem [resolvable:$true] %s360
      %366 = dma.vmem_to_hbm [thread:$0]  %s361, 1024, %s3, [#allocation4], 128, 128, 8
    $region29: #{feed_embed_forward.1} parent=1 // pred_fallthru
      _
    // Predicated region
    $region30: #{feed_embed_forward.1} parent=1 // pred_check
      _
    $region31: #{feed_embed_forward.1} parent=1 // pred_check_branch
      %368 = sbr.rel (0) target = $region33
    $region32: #{feed_embed_forward.1} parent=1 // pred_region
      %369 = dma.done [#allocation4], 1024
    $region33: #{feed_embed_forward.1} parent=1 // pred_fallthru
      _
    %370 = vsyncpa [#allocation3], 1
    %371 = vsyncpa [#allocation6], 1
    %372 = vsyncpa [#allocation4], 1

</llo_original>
